<compile_context>
chip_gen: v7x
topology: tpu7x:2x2x1
jax: 0.10.0
libtpu: 0.0.40
codegen_flags: <defaults>
</compile_context>

<pallas_src>
import functools

import numpy as np
import jax
import jax.numpy as jnp
from jax.experimental import pallas as pl
from jax.experimental.pallas import tpu as pltpu


def _stable_silu_f32(y):
    """Numerically stable SiLU in f32: exp(-|y|) never overflows; the approx
    EUP reciprocal + two-sided select recovers sigmoid on both branches."""
    z = jnp.exp(-jnp.abs(y))
    r = pl.reciprocal(1.0 + z, approx=True)
    return y * jnp.where(y >= 0.0, r, z * r)


def _gsconv_kernel(x_ref, w1_ref, b1_ref, w2_ref, b2_ref, o_ref, *,
                   e1, e2, compute_dtype):
    """One (Cin, T) spatial tile -> (2*c_, T) shuffled output tile.

    Weights arrive with the BN scale folded in and rows pre-permuted so that
    the contiguous output slices below realize GSConv's channel shuffle.
    """
    c_ = e1 + e2

    x = x_ref[...]
    if x.dtype != compute_dtype:
        x = x.astype(compute_dtype)

    # cv1: 1x1 conv == (c_, Cin) @ (Cin, T) on the MXU (BN scale pre-folded).
    y1 = jnp.dot(w1_ref[...], x, preferred_element_type=jnp.float32)
    y1 = _stable_silu_f32(y1 + b1_ref[...])

    # cv2: 1x1 conv on y1 (same folding).
    y2 = jnp.dot(w2_ref[...], y1.astype(compute_dtype),
                 preferred_element_type=jnp.float32)
    y2 = _stable_silu_f32(y2 + b2_ref[...])

    # Channel shuffle: interleave the (pre-permuted) y1 / y2 channel blocks.
    pieces = [y1[0:e1, :], y2[0:e2, :], y1[e1:, :], y2[e2:, :]]
    if e1 % 8 == 0 and e2 % 8 == 0 and e2 > 0:
        # Sublane-aligned: four direct slice stores, no concatenated temp.
        o_ref[0:e1, :] = pieces[0].astype(o_ref.dtype)
        o_ref[e1:c_, :] = pieces[1].astype(o_ref.dtype)
        o_ref[c_:c_ + e2, :] = pieces[2].astype(o_ref.dtype)
        o_ref[c_ + e2:, :] = pieces[3].astype(o_ref.dtype)
    else:
        # Tiny / unaligned channel counts: one full-tile store.
        pieces = [p for p in pieces if p.shape[0] > 0]
        o_ref[...] = jnp.concatenate(pieces, axis=0).astype(o_ref.dtype)


def _vmem_limit_bytes():
    """Generation-aware scoped-VMEM budget: ~3/4 of physical capacity, capped
    at 96 MiB (128 MiB parts) / 48 MiB (64 MiB v7x parts)."""
    try:
        cap = int(pltpu.get_tpu_info().vmem_capacity_bytes)
    except Exception:
        cap = 64 << 20          # conservative fallback: assume a 64 MiB part
    return max(32 << 20, min((cap * 3) // 4, 96 << 20))


def _pick_spatial_tile(hw, batch, cin, c_, *, in_itemsize, out_itemsize,
                       compute_itemsize, budget_bytes, max_tile):
    """Largest lane tile whose double-buffered I/O + in-kernel intermediates
    fit the budget, rounded to a 256 multiple (MXU-friendly); a full-extent
    block if the whole spatial dim fits."""
    n = 2 * c_
    per_pos = (2 * cin * in_itemsize            # double-buffered input tile
               + 2 * n * out_itemsize           # double-buffered output tile
               + 4 * c_ * 4                     # y1/y2 f32 + SiLU temporaries
               + (cin + c_) * compute_itemsize  # MXU-dtype copies of x / y1
               + n * 4)                         # concat temp (fallback store)
    t = budget_bytes // max(per_pos, 1)
    t = max(128, min(int(max_tile), int(t)))
    t = (t // 256) * 256 if t >= 256 else 128
    if hw <= t:
        return hw               # full-extent block is always legal
    # v7x megacore balance: with one batch item prefer an even tile count so
    # both TensorCores get equal work.
    if batch == 1:
        cand = t
        while cand >= 128:
            if (-(-hw // cand)) % 2 == 0:
                return cand
            cand -= 128
    return t


def _fold_bn(gamma, beta, mean, var, eps=1e-3):
    scale = gamma / jnp.sqrt(var + eps)
    bias = beta - mean * scale
    return scale, bias


def gsconv_forward(x_nchw, params, *, compute_dtype=jnp.bfloat16,
                   out_dtype=None, max_spatial_tile=8192):
    """GSConv forward. x_nchw: (B, Cin, H, W) -> (B, 2*c_, H, W).

    Output dtype defaults to the input dtype (pass jnp.bfloat16 activations
    straight through from a bf16 producer for half the HBM traffic)."""
    B, Cin, H, W = x_nchw.shape
    w1 = params["w1"]            # (Cin, c_)   1x1 conv weight, (in, out)
    w2 = params["w2"]            # (c_,  c_)
    c_ = w1.shape[1]
    n = 2 * c_
    e1 = (c_ + 1) // 2           # even x1 channels -> out[0:e1]
    e2 = c_ // 2                 # odd  x1 channels -> out[c_:c_+e2]
    out_dtype = x_nchw.dtype if out_dtype is None else out_dtype

    s1, b1 = _fold_bn(params["g1"], params["be1"], params["m1"], params["v1"])
    s2, b2 = _fold_bn(params["g2"], params["be2"], params["m2"], params["v2"])

    # GSConv channel shuffle as static permutations, pre-applied to the
    # weight/bias channel axes (free at trace time; x2 = [x1 || cv2(x1)]).
    idx = np.arange(c_)
    evens, odds = idx[idx % 2 == 0], idx[idx % 2 == 1]
    perm1 = np.concatenate([evens, odds])
    perm2 = perm1 if c_ % 2 == 0 else np.concatenate([odds, evens])

    # Fold BN scale into weights, permute, lay out as (out, in) for the
    # NCHW-native (c_, Cin) @ (Cin, T) matmul; cast MXU operands to bf16.
    w1p = (w1[:, perm1] * s1[perm1][None, :]).T.astype(compute_dtype)
    w2p = (w2[perm1][:, perm2] * s2[perm2][None, :]).T.astype(compute_dtype)
    b1p = b1[perm1][:, None].astype(jnp.float32)       # (c_, 1)
    b2p = b2[perm2][:, None].astype(jnp.float32)       # (c_, 1)

    HW = H * W
    x3 = x_nchw.reshape(B, Cin, HW)       # trailing-dim collapse, no relayout

    in_bytes = jnp.dtype(x_nchw.dtype).itemsize
    out_bytes = jnp.dtype(out_dtype).itemsize
    c_bytes = jnp.dtype(compute_dtype).itemsize

    vmem_limit = _vmem_limit_bytes()
    # Constant operands are double-buffered by the auto-pipeline; subtract
    # them (plus headroom) from the tiling budget instead of relying on
    # single-buffering support.
    fixed = 2 * ((c_ * Cin + c_ * c_) * c_bytes + 2 * c_ * 4)
    tile_budget = max(int((vmem_limit - fixed) * 0.85), 1 << 20)
    T = _pick_spatial_tile(HW, B, Cin, c_,
                           in_itemsize=in_bytes, out_itemsize=out_bytes,
                           compute_itemsize=c_bytes,
                           budget_bytes=tile_budget, max_tile=max_spatial_tile)
    grid = (B, pl.cdiv(HW, T))

    cost = pl.CostEstimate(
        flops=2 * B * HW * (c_ * Cin + c_ * c_),
        transcendentals=4 * B * HW * c_,
        bytes_accessed=(B * Cin * HW * in_bytes + B * n * HW * out_bytes
                        + (c_ * Cin + c_ * c_) * c_bytes + 2 * c_ * 4),
    )

    kernel = functools.partial(_gsconv_kernel, e1=e1, e2=e2,
                               compute_dtype=compute_dtype)

    out = pl.pallas_call(
        kernel,
        out_shape=jax.ShapeDtypeStruct((B, n, HW), out_dtype),
        grid_spec=pltpu.PrefetchScalarGridSpec(
            num_scalar_prefetch=0,
            grid=grid,
            in_specs=[
                pl.BlockSpec((None, Cin, T), lambda b, t: (b, 0, t)),  # x tile
                pl.BlockSpec((c_, Cin), lambda b, t: (0, 0)),          # W1'
                pl.BlockSpec((c_, 1), lambda b, t: (0, 0)),            # bias1
                pl.BlockSpec((c_, c_), lambda b, t: (0, 0)),           # W2'
                pl.BlockSpec((c_, 1), lambda b, t: (0, 0)),            # bias2
            ],
            out_specs=pl.BlockSpec((None, n, T), lambda b, t: (b, 0, t)),
        ),
        compiler_params=pltpu.CompilerParams(
            dimension_semantics=("parallel", "parallel"),
            vmem_limit_bytes=vmem_limit),
        cost_estimate=cost,
    )(x3, w1p, b1p, w2p, b2p)

    return out.reshape(B, n, H, W)        # trailing-dim split, no relayout


def _reference_gsconv(x_nchw, params):
    """Pure-JAX reference of the PyTorch GSConv forward (eval-mode BN)."""
    def baseconv(x, w, g, be, m, v):
        y = jnp.einsum("bchw,co->bohw", x, w)          # 1x1 conv in NCHW
        s = g / jnp.sqrt(v + 1e-3)
        b = be - m * s
        y = y * s[None, :, None, None] + b[None, :, None, None]
        return y * jax.nn.sigmoid(y)

    x1 = baseconv(x_nchw, params["w1"], params["g1"], params["be1"],
                  params["m1"], params["v1"])
    x2 = jnp.concatenate(
        [x1, baseconv(x1, params["w2"], params["g2"], params["be2"],
                      params["m2"], params["v2"])], axis=1)
    b, nch, h, w = x2.shape
    y = x2.reshape(b * nch // 2, 2, h * w)
    y = jnp.transpose(y, (1, 0, 2))
    y = y.reshape(2, -1, nch // 2, h, w)
    return jnp.concatenate([y[0], y[1]], axis=1)


def _make_params(key, cin, c_):
    ks = jax.random.split(key, 10)
    return {
        # conv weights stored as (in_ch, out_ch) for the matmul formulation
        "w1": 0.2 * jax.random.normal(ks[0], (cin, c_), jnp.float32),
        "w2": 0.2 * jax.random.normal(ks[1], (c_, c_), jnp.float32),
        # BN1 (gamma, beta, running_mean, running_var)
        "g1": 1.0 + 0.1 * jax.random.normal(ks[2], (c_,), jnp.float32),
        "be1": 0.1 * jax.random.normal(ks[3], (c_,), jnp.float32),
        "m1": 0.05 * jax.random.normal(ks[4], (c_,), jnp.float32),
        "v1": 1.0 + 0.1 * jax.nn.softplus(
            jax.random.normal(ks[5], (c_,), jnp.float32)),
        # BN2
        "g2": 1.0 + 0.1 * jax.random.normal(ks[6], (c_,), jnp.float32),
        "be2": 0.1 * jax.random.normal(ks[7], (c_,), jnp.float32),
        "m2": 0.05 * jax.random.normal(ks[8], (c_,), jnp.float32),
        "v2": 1.0 + 0.1 * jax.nn.softplus(
            jax.random.normal(ks[9], (c_,), jnp.float32)),
    }


if __name__ == "__main__":
    key = jax.random.PRNGKey(0)

    # ---- Case 1: main shape (B=2, Cin=4, 16x16, Cout=8 -> c_=4) -------------
    B, Cin, H, W = 2, 4, 16, 16
    Cout = 8
    c_ = Cout // 2
    k1, k2, k3, kx1, kx2, kx3 = jax.random.split(key, 6)
    params = _make_params(k1, Cin, c_)
    x = jax.random.normal(kx1, (B, Cin, H, W), jnp.float32)
    ref = _reference_gsconv(x, params)

    # f32-MXU run: validates BN-fold + shuffle permutation tightly (tolerance
    # limited only by the approximate EUP reciprocal in the stable sigmoid).
    out_f32 = jax.block_until_ready(
        gsconv_forward(x, params, compute_dtype=jnp.float32))
    assert out_f32.shape == (B, Cout, H, W), out_f32.shape
    assert jnp.allclose(out_f32, ref, atol=2e-2, rtol=2e-2), \
        float(jnp.max(jnp.abs(out_f32 - ref)))

    # Default bf16-MXU run (f32 in / f32 out).
    out_def = jax.block_until_ready(gsconv_forward(x, params))
    assert out_def.shape == (B, Cout, H, W), out_def.shape
    assert jnp.allclose(out_def, ref, atol=6e-2, rtol=6e-2), \
        float(jnp.max(jnp.abs(out_def - ref)))

    # bf16-in / bf16-out run (simulates a bf16 producer/consumer: halves HBM
    # traffic on this memory-bound kernel).
    x_bf16 = x.astype(jnp.bfloat16)
    out_bf16 = jax.block_until_ready(gsconv_forward(x_bf16, params))
    assert out_bf16.dtype == jnp.bfloat16
    assert jnp.allclose(out_bf16.astype(jnp.float32), ref,
                        atol=1e-1, rtol=1e-1), \
        float(jnp.max(jnp.abs(out_bf16.astype(jnp.float32) - ref)))

    # ---- Case 2: odd c_ (Cout=6 -> c_=3) validates the shuffle permutation
    # for odd channel counts and the unaligned (concat) store path. ----------
    B2, Cin2, H2, W2, Cout2 = 1, 5, 9, 9, 6
    params2 = _make_params(k2, Cin2, Cout2 // 2)
    x2 = jax.random.normal(kx2, (B2, Cin2, H2, W2), jnp.float32)
    ref2 = _reference_gsconv(x2, params2)
    out2 = jax.block_until_ready(
        gsconv_forward(x2, params2, compute_dtype=jnp.float32))
    assert out2.shape == (B2, Cout2, H2, W2), out2.shape
    assert jnp.allclose(out2, ref2, atol=2e-2, rtol=2e-2), \
        float(jnp.max(jnp.abs(out2 - ref2)))

    # ---- Case 3: ragged last spatial tile (HW=169 with T capped at 128) and
    # the B==1 megacore-balance branch. ---------------------------------------
    B3, Cin3, H3, W3, Cout3 = 1, 4, 13, 13, 8
    params3 = _make_params(k3, Cin3, Cout3 // 2)
    x3 = jax.random.normal(kx3, (B3, Cin3, H3, W3), jnp.float32)
    ref3 = _reference_gsconv(x3, params3)
    out3 = jax.block_until_ready(
        gsconv_forward(x3, params3, compute_dtype=jnp.float32,
                       max_spatial_tile=128))
    assert out3.shape == (B3, Cout3, H3, W3), out3.shape
    assert jnp.allclose(out3, ref3, atol=2e-2, rtol=2e-2), \
        float(jnp.max(jnp.abs(out3 - ref3)))

    print("KERNEL_OK")
</pallas_src>

<mosaic_0001>
module attributes {stable_mosaic.version = 11 : i64} {
  func.func @_gsconv_kernel(%arg0: i32, %arg1: i32, %arg2: memref<1x4x256xf32, #tpu.memory_space<vmem>>, %arg3: memref<4x4xf32, #tpu.memory_space<vmem>>, %arg4: memref<4x1xf32, #tpu.memory_space<vmem>>, %arg5: memref<4x4xf32, #tpu.memory_space<vmem>>, %arg6: memref<4x1xf32, #tpu.memory_space<vmem>>, %arg7: memref<1x8x256xf32, #tpu.memory_space<vmem>>) attributes {dimension_semantics = [#tpu.dimension_semantics<parallel>, #tpu.dimension_semantics<parallel>], iteration_bounds = array<i64: 2, 1>, scalar_prefetch = 0 : i64, scratch_operands = 0 : i64, tpu.core_type = #tpu.core_type<tc>, window_params = [{transform_indices = @transform_0, window_bounds = array<i64: 1, 4, 256>}, {pipeline_mode = #tpu.pipeline_mode<synchronous>, transform_indices = @transform_1, window_bounds = array<i64: 4, 4>}, {pipeline_mode = #tpu.pipeline_mode<synchronous>, transform_indices = @transform_2, window_bounds = array<i64: 4, 1>}, {pipeline_mode = #tpu.pipeline_mode<synchronous>, transform_indices = @transform_3, window_bounds = array<i64: 4, 4>}, {pipeline_mode = #tpu.pipeline_mode<synchronous>, transform_indices = @transform_4, window_bounds = array<i64: 4, 1>}, {transform_indices = @transform_5, window_bounds = array<i64: 1, 8, 256>}]} {
    %c0 = arith.constant 0 : index
    %c0_0 = arith.constant 0 : index
    %c0_1 = arith.constant 0 : index
    %0 = vector.load %arg2[%c0, %c0_0, %c0_1] : memref<1x4x256xf32, #tpu.memory_space<vmem>>, vector<1x4x256xf32>
    %1 = vector.shape_cast %0 : vector<1x4x256xf32> to vector<4x256xf32>
    %c0_2 = arith.constant 0 : index
    %c0_3 = arith.constant 0 : index
    %2 = vector.load %arg3[%c0_2, %c0_3] : memref<4x4xf32, #tpu.memory_space<vmem>>, vector<4x4xf32>
    %cst = arith.constant dense<0.000000e+00> : vector<4x256xf32>
    %3 = tpu.matmul %2, %1, %cst {dimension_numbers = #tpu.dot_dimension_numbers<[1], [0], [0], [1], [0, 0, 1, 1], [], []>} : vector<4x4xf32>, vector<4x256xf32>, vector<4x256xf32> -> vector<4x256xf32>
    %c0_4 = arith.constant 0 : index
    %c0_5 = arith.constant 0 : index
    %4 = vector.load %arg4[%c0_4, %c0_5] : memref<4x1xf32, #tpu.memory_space<vmem>>, vector<4x1xf32>
    %5 = vector.broadcast %4 : vector<4x1xf32> to vector<4x256xf32>
    %6 = arith.addf %3, %5 : vector<4x256xf32>
    %7 = math.absf %6 : vector<4x256xf32>
    %cst_6 = arith.constant 0.000000e+00 : f32
    %8 = vector.broadcast %cst_6 : f32 to vector<4x256xf32>
    %9 = arith.subf %8, %7 : vector<4x256xf32>
    %10 = math.exp %9 : vector<4x256xf32>
    %cst_7 = arith.constant 1.000000e+00 : f32
    %11 = vector.broadcast %cst_7 : f32 to vector<4x256xf32>
    %12 = arith.addf %11, %10 : vector<4x256xf32>
    %13 = tpu.reciprocal %12 {approx = true} : vector<4x256xf32> -> vector<4x256xf32>
    %cst_8 = arith.constant 0.000000e+00 : f32
    %14 = vector.broadcast %cst_8 : f32 to vector<4x256xf32>
    %15 = arith.cmpf oge, %6, %14 : vector<4x256xf32>
    %16 = arith.mulf %10, %13 : vector<4x256xf32>
    %17 = arith.select %15, %13, %16 : vector<4x256xi1>, vector<4x256xf32>
    %18 = arith.mulf %6, %17 : vector<4x256xf32>
    %c0_9 = arith.constant 0 : index
    %c0_10 = arith.constant 0 : index
    %19 = vector.load %arg5[%c0_9, %c0_10] : memref<4x4xf32, #tpu.memory_space<vmem>>, vector<4x4xf32>
    %cst_11 = arith.constant dense<0.000000e+00> : vector<4x256xf32>
    %20 = tpu.matmul %19, %18, %cst_11 {dimension_numbers = #tpu.dot_dimension_numbers<[1], [0], [0], [1], [0, 0, 1, 1], [], []>} : vector<4x4xf32>, vector<4x256xf32>, vector<4x256xf32> -> vector<4x256xf32>
    %c0_12 = arith.constant 0 : index
    %c0_13 = arith.constant 0 : index
    %21 = vector.load %arg6[%c0_12, %c0_13] : memref<4x1xf32, #tpu.memory_space<vmem>>, vector<4x1xf32>
    %22 = vector.broadcast %21 : vector<4x1xf32> to vector<4x256xf32>
    %23 = arith.addf %20, %22 : vector<4x256xf32>
    %24 = math.absf %23 : vector<4x256xf32>
    %cst_14 = arith.constant 0.000000e+00 : f32
    %25 = vector.broadcast %cst_14 : f32 to vector<4x256xf32>
    %26 = arith.subf %25, %24 : vector<4x256xf32>
    %27 = math.exp %26 : vector<4x256xf32>
    %cst_15 = arith.constant 1.000000e+00 : f32
    %28 = vector.broadcast %cst_15 : f32 to vector<4x256xf32>
    %29 = arith.addf %28, %27 : vector<4x256xf32>
    %30 = tpu.reciprocal %29 {approx = true} : vector<4x256xf32> -> vector<4x256xf32>
    %cst_16 = arith.constant 0.000000e+00 : f32
    %31 = vector.broadcast %cst_16 : f32 to vector<4x256xf32>
    %32 = arith.cmpf oge, %23, %31 : vector<4x256xf32>
    %33 = arith.mulf %27, %30 : vector<4x256xf32>
    %34 = arith.select %32, %30, %33 : vector<4x256xi1>, vector<4x256xf32>
    %35 = arith.mulf %23, %34 : vector<4x256xf32>
    %36 = vector.extract_strided_slice %18 {offsets = [0, 0], sizes = [2, 256], strides = [1, 1]} : vector<4x256xf32> to vector<2x256xf32>
    %37 = vector.extract_strided_slice %35 {offsets = [0, 0], sizes = [2, 256], strides = [1, 1]} : vector<4x256xf32> to vector<2x256xf32>
    %38 = vector.extract_strided_slice %18 {offsets = [2, 0], sizes = [2, 256], strides = [1, 1]} : vector<4x256xf32> to vector<2x256xf32>
    %39 = vector.extract_strided_slice %35 {offsets = [2, 0], sizes = [2, 256], strides = [1, 1]} : vector<4x256xf32> to vector<2x256xf32>
    %40 = tpu.concatenate %36, %37, %38, %39 in 0 : vector<2x256xf32>, vector<2x256xf32>, vector<2x256xf32>, vector<2x256xf32> -> vector<8x256xf32>
    %c0_17 = arith.constant 0 : index
    %c0_18 = arith.constant 0 : index
    %c0_19 = arith.constant 0 : index
    %41 = vector.load %arg7[%c0_17, %c0_18, %c0_19] : memref<1x8x256xf32, #tpu.memory_space<vmem>>, vector<1x8x256xf32>
    %42 = vector.shape_cast %41 : vector<1x8x256xf32> to vector<8x256xf32>
    %43 = vector.shape_cast %40 : vector<8x256xf32> to vector<1x8x256xf32>
    tpu.vector_store %arg7[%c0_17, %c0_18, %c0_19], %43 {strides = array<i32>} : memref<1x8x256xf32, #tpu.memory_space<vmem>>, vector<1x8x256xf32>,
    return
  }
  func.func @transform_0(%arg0: i32, %arg1: i32) -> (i32, i32, i32) {
    %c0_i32 = arith.constant 0 : i32
    %c0_i32_0 = arith.constant 0 : i32
    return %arg0, %c0_i32, %arg1 : i32, i32, i32
  }
  func.func @transform_1(%arg0: i32, %arg1: i32) -> (i32, i32) {
    %c0_i32 = arith.constant 0 : i32
    %c0_i32_0 = arith.constant 0 : i32
    %c0_i32_1 = arith.constant 0 : i32
    return %c0_i32, %c0_i32_0 : i32, i32
  }
  func.func @transform_2(%arg0: i32, %arg1: i32) -> (i32, i32) {
    %c0_i32 = arith.constant 0 : i32
    %c0_i32_0 = arith.constant 0 : i32
    %c0_i32_1 = arith.constant 0 : i32
    return %c0_i32, %c0_i32_0 : i32, i32
  }
  func.func @transform_3(%arg0: i32, %arg1: i32) -> (i32, i32) {
    %c0_i32 = arith.constant 0 : i32
    %c0_i32_0 = arith.constant 0 : i32
    %c0_i32_1 = arith.constant 0 : i32
    return %c0_i32, %c0_i32_0 : i32, i32
  }
  func.func @transform_4(%arg0: i32, %arg1: i32) -> (i32, i32) {
    %c0_i32 = arith.constant 0 : i32
    %c0_i32_0 = arith.constant 0 : i32
    %c0_i32_1 = arith.constant 0 : i32
    return %c0_i32, %c0_i32_0 : i32, i32
  }
  func.func @transform_5(%arg0: i32, %arg1: i32) -> (i32, i32, i32) {
    %c0_i32 = arith.constant 0 : i32
    %c0_i32_0 = arith.constant 0 : i32
    return %arg0, %c0_i32, %arg1 : i32, i32, i32
  }
}

</mosaic_0001>

<llo_original>
// kernel: tpu_custom_call.1
$region0: #{tpu_custom_call.1}
  #allocation0 [shape = 'u32[]', space=smem, size = 0x4, offset = 0x4, fixed_abs, tag = 'smem constant byte address 0x4 - core index']
  #allocation1 [shape = 'u32[144,128]{1,0:T(1,128)}', space=vmem, size = 0x12000, scoped, tag = 'internal scratch']
  %s0 = inlined_call_operand.hbm [shape: f32[2,4,256], index: 0, kind: input, shape index: {}]
  %s1 = inlined_call_operand.vmem [shape: f32[4,4], index: 1, kind: input, shape index: {}]
  %s2 = inlined_call_operand.vmem [shape: f32[4,1], index: 2, kind: input, shape index: {}]
  %s3 = inlined_call_operand.vmem [shape: f32[4,4], index: 3, kind: input, shape index: {}]
  %s4 = inlined_call_operand.vmem [shape: f32[4,1], index: 4, kind: input, shape index: {}]
  %s5 = inlined_call_operand.hbm [shape: f32[2,8,256], index: 5, kind: output, shape index: {}]
  %s6 = sld [smem:[#allocation0]]
  $region57: #{tpu_custom_call.1} parent=0
    _
  %s8 = ssub.s32 1, %s6
  %s9 = scalar_select 0, %s8, %s6
  $region1: #{tpu_custom_call.1} parent=0
    #allocation2 [shape = 'u8[8192]{0}', space=vmem, size = 0x2000, scoped, tag = 'input window, operand 0']
    #allocation3 [shape = 's32[2]{0}', space=sflag, size = 0x8, scoped, tag = 'scoped memory for tpu_custom_call.1']
    #allocation4 [shape = 's32[2]{0}', space=sflag, size = 0x8, scoped, tag = 'scoped memory for tpu_custom_call.1']
    #allocation5 [shape = 'u8[16384]{0}', space=vmem, size = 0x4000, scoped, tag = 'output window, operand 0']
    %10 = vsyncpa [#allocation3], 0
    %s11 = scalar_lea.sflag [#allocation3], 1
    %12 = vsyncpa %s11, 0
    %13 = vsyncpa [#allocation4], 0
    %s14 = scalar_lea.sflag [#allocation4], 1
    %15 = vsyncpa %s14, 0
    loop: start=0, step=1, limit=4
    $region2: #{tpu_custom_call.1} parent=1 // loop_pre_header
      _
    $region3: #{tpu_custom_call.1} parent=1 // loop_header
      %s17 = sphi 0, %s21
      %p18 = scmp.ge.s32.totalorder %s17, 4
      %s24 = sphi 0, %s36
      %s25 = sphi 0, %s32
      %s26 = sphi 0, %s24
      %s27 = sphi 0, %s25
      %s28 = sphi 0, %s26
      %s29 = sphi 0, %s27
      %s41 = sphi 0, %s43
      %s44 = sphi 0, %s41
      %s45 = sphi 0, %s44
      %s61 = sphi 0, %s45
      %s65 = sphi 0, %s65
      %s67 = sphi 0, %s65
      %s68 = sphi 0, %s67
      %s82 = sphi 0, %s68
      %s86 = sphi 0, %s86
      %s88 = sphi 0, %s86
      %s89 = sphi 0, %s88
      %s103 = sphi 0, %s89
      %s107 = sphi 0, %s107
      %s109 = sphi 0, %s107
      %s110 = sphi 0, %s109
      %s124 = sphi 0, %s110
      %s128 = sphi 0, %s128
      %s130 = sphi 0, %s128
      %s131 = sphi 0, %s130
      %s145 = sphi 0, %s131
      %s153 = sphi 0, %s155
      %s156 = sphi 0, %s153
      %s157 = sphi 0, %s156
      %s173 = sphi 0, %s157
    $region4: #{tpu_custom_call.1} parent=1 // loop_header_branch
      %20 = sbr.rel (%p18) target = $region8
    $region5: #{tpu_custom_call.1} parent=1 // loop_body
      %s22 = ssub.s32 %s17, 1
      %s23 = ssub.s32 %s17, 2
      %s30 = sadd.s32 1, %s25
      %p31 = scmp.ge.s32.totalorder %s30, 1
      %s32 = scalar_select %p31, 0, %s30
      %s33 = sadd.s32 1, %s24
      %s34 = scalar_select %p31, %s33, %s24
      %p35 = scmp.ge.s32.totalorder %s34, 2
      %s36 = scalar_select %p35, 0, %s34
      %s37 = ssub.s32 %s24, %s36
      %s38 = ssub.s32 %s25, %s32
      %s39 = sor.u32 %s37, %s38
      %p40 = scmp.eq.s32.totalorder %s39, 0
      %s42 = sadd.s32 %s41, 1
      %s43 = scalar_select %p40, %s41, %s42
      %p46 = pneg %p40
      %p47 = scmp.eq.s32.totalorder %s17, 1
      %p48 = por %p46, %p47
      %p49 = scmp.ne.s32.totalorder %s41, %s44
      %p50 = scmp.eq.s32.totalorder %s17, 0
      %p51 = por %p49, %p50
      %p52 = scmp.ne.s32.totalorder %s41, %s44
      %p53 = scmp.eq.s32.totalorder %s22, 1
      %p54 = por %p52, %p53
      %p55 = scmp.ne.s32.totalorder %s44, %s45
      %p56 = scmp.eq.s32.totalorder %s22, 0
      %p57 = por %p55, %p56
      %p58 = scmp.ne.s32.totalorder %s44, %s45
      %p59 = scmp.eq.s32.totalorder %s23, 1
      %p60 = por %p58, %p59
      %p62 = scmp.ne.s32.totalorder %s45, %s61
      %p63 = scmp.eq.s32.totalorder %s23, 0
      %p64 = por %p62, %p63
      %s66 = sadd.s32 %s65, 1
      %p69 = scmp.eq.s32.totalorder %s17, 1
      %p70 = scmp.ne.s32.totalorder %s65, %s67
      %p71 = scmp.eq.s32.totalorder %s17, 0
      %p72 = por %p70, %p71
      %p73 = scmp.ne.s32.totalorder %s65, %s67
      %p74 = scmp.eq.s32.totalorder %s22, 1
      %p75 = por %p73, %p74
      %p76 = scmp.ne.s32.totalorder %s67, %s68
      %p77 = scmp.eq.s32.totalorder %s22, 0
      %p78 = por %p76, %p77
      %p79 = scmp.ne.s32.totalorder %s67, %s68
      %p80 = scmp.eq.s32.totalorder %s23, 1
      %p81 = por %p79, %p80
      %p83 = scmp.ne.s32.totalorder %s68, %s82
      %p84 = scmp.eq.s32.totalorder %s23, 0
      %p85 = por %p83, %p84
      %s87 = sadd.s32 %s86, 1
      %p90 = scmp.eq.s32.totalorder %s17, 1
      %p91 = scmp.ne.s32.totalorder %s86, %s88
      %p92 = scmp.eq.s32.totalorder %s17, 0
      %p93 = por %p91, %p92
      %p94 = scmp.ne.s32.totalorder %s86, %s88
      %p95 = scmp.eq.s32.totalorder %s22, 1
      %p96 = por %p94, %p95
      %p97 = scmp.ne.s32.totalorder %s88, %s89
      %p98 = scmp.eq.s32.totalorder %s22, 0
      %p99 = por %p97, %p98
      %p100 = scmp.ne.s32.totalorder %s88, %s89
      %p101 = scmp.eq.s32.totalorder %s23, 1
      %p102 = por %p100, %p101
      %p104 = scmp.ne.s32.totalorder %s89, %s103
      %p105 = scmp.eq.s32.totalorder %s23, 0
      %p106 = por %p104, %p105
      %s108 = sadd.s32 %s107, 1
      %p111 = scmp.eq.s32.totalorder %s17, 1
      %p112 = scmp.ne.s32.totalorder %s107, %s109
      %p113 = scmp.eq.s32.totalorder %s17, 0
      %p114 = por %p112, %p113
      %p115 = scmp.ne.s32.totalorder %s107, %s109
      %p116 = scmp.eq.s32.totalorder %s22, 1
      %p117 = por %p115, %p116
      %p118 = scmp.ne.s32.totalorder %s109, %s110
      %p119 = scmp.eq.s32.totalorder %s22, 0
      %p120 = por %p118, %p119
      %p121 = scmp.ne.s32.totalorder %s109, %s110
      %p122 = scmp.eq.s32.totalorder %s23, 1
      %p123 = por %p121, %p122
      %p125 = scmp.ne.s32.totalorder %s110, %s124
      %p126 = scmp.eq.s32.totalorder %s23, 0
      %p127 = por %p125, %p126
      %s129 = sadd.s32 %s128, 1
      %p132 = scmp.eq.s32.totalorder %s17, 1
      %p133 = scmp.ne.s32.totalorder %s128, %s130
      %p134 = scmp.eq.s32.totalorder %s17, 0
      %p135 = por %p133, %p134
      %p136 = scmp.ne.s32.totalorder %s128, %s130
      %p137 = scmp.eq.s32.totalorder %s22, 1
      %p138 = por %p136, %p137
      %p139 = scmp.ne.s32.totalorder %s130, %s131
      %p140 = scmp.eq.s32.totalorder %s22, 0
      %p141 = por %p139, %p140
      %p142 = scmp.ne.s32.totalorder %s130, %s131
      %p143 = scmp.eq.s32.totalorder %s23, 1
      %p144 = por %p142, %p143
      %p146 = scmp.ne.s32.totalorder %s131, %s145
      %p147 = scmp.eq.s32.totalorder %s23, 0
      %p148 = por %p146, %p147
      %s149 = ssub.s32 %s24, %s36
      %s150 = ssub.s32 %s25, %s32
      %s151 = sor.u32 %s149, %s150
      %p152 = scmp.eq.s32.totalorder %s151, 0
      %s154 = sadd.s32 %s153, 1
      %s155 = scalar_select %p152, %s153, %s154
      %p158 = pneg %p152
      %p159 = scmp.eq.s32.totalorder %s17, 1
      %p160 = por %p158, %p159
      %p161 = scmp.ne.s32.totalorder %s153, %s156
      %p162 = scmp.eq.s32.totalorder %s17, 0
      %p163 = por %p161, %p162
      %p164 = scmp.ne.s32.totalorder %s153, %s156
      %p165 = scmp.eq.s32.totalorder %s22, 1
      %p166 = por %p164, %p165
      %p167 = scmp.ne.s32.totalorder %s156, %s157
      %p168 = scmp.eq.s32.totalorder %s22, 0
      %p169 = por %p167, %p168
      %p170 = scmp.ne.s32.totalorder %s156, %s157
      %p171 = scmp.eq.s32.totalorder %s23, 1
      %p172 = por %p170, %p171
      %p174 = scmp.ne.s32.totalorder %s157, %s173
      %p175 = scmp.eq.s32.totalorder %s23, 0
      %p176 = por %p174, %p175
      %p177 = scmp.le.s32.totalorder 1, %s17
      %p178 = scmp.lt.s32.totalorder %s17, 3
      %p179 = pnand %p177, %p178
      %p180 = pneg %p179
      // Predicated region
      $region9: #{tpu_custom_call.1} parent=5 // pred_check
        _
      $region10: #{tpu_custom_call.1} parent=5 // pred_check_branch
        %182 = sbr.rel (%p179) target = $region12
      $region11: #{tpu_custom_call.1} parent=5 // pred_region
        %s183 = ssub.s32 %s17, 1
        // Predicated region
        $region13: #{tpu_custom_call.1} parent=11 // pred_check
          %p184 = pneg %p78
        $region14: #{tpu_custom_call.1} parent=11 // pred_check_branch
          %186 = sbr.rel (%p184) target = $region16
        $region15: #{tpu_custom_call.1} parent=11 // pred_region
          _
        $region16: #{tpu_custom_call.1} parent=11 // pred_fallthru
          _
        // Predicated region
        $region17: #{tpu_custom_call.1} parent=11 // pred_check
          %p187 = pneg %p99
        $region18: #{tpu_custom_call.1} parent=11 // pred_check_branch
          %189 = sbr.rel (%p187) target = $region20
        $region19: #{tpu_custom_call.1} parent=11 // pred_region
          _
        $region20: #{tpu_custom_call.1} parent=11 // pred_fallthru
          _
        // Predicated region
        $region21: #{tpu_custom_call.1} parent=11 // pred_check
          %p190 = pneg %p120
        $region22: #{tpu_custom_call.1} parent=11 // pred_check_branch
          %192 = sbr.rel (%p190) target = $region24
        $region23: #{tpu_custom_call.1} parent=11 // pred_region
          _
        $region24: #{tpu_custom_call.1} parent=11 // pred_fallthru
          _
        // Predicated region
        $region25: #{tpu_custom_call.1} parent=11 // pred_check
          %p193 = pneg %p141
        $region26: #{tpu_custom_call.1} parent=11 // pred_check_branch
          %195 = sbr.rel (%p193) target = $region28
        $region27: #{tpu_custom_call.1} parent=11 // pred_region
          _
        $region28: #{tpu_custom_call.1} parent=11 // pred_fallthru
          _
      $region12: #{tpu_custom_call.1} parent=5 // pred_fallthru
        _
      %p196 = scmp.lt.s32.totalorder %s17, 2
      // Predicated region
      $region29: #{tpu_custom_call.1} parent=5 // pred_check
        %p197 = pneg %p196
      $region30: #{tpu_custom_call.1} parent=5 // pred_check_branch
        %199 = sbr.rel (%p197) target = $region32
      $region31: #{tpu_custom_call.1} parent=5 // pred_region
        // Predicated region
        $region33: #{tpu_custom_call.1} parent=31 // pred_check
          %p200 = pneg %p51
        $region34: #{tpu_custom_call.1} parent=31 // pred_check_branch
          %202 = sbr.rel (%p200) target = $region36
        $region35: #{tpu_custom_call.1} parent=31 // pred_region
          %s203 = sand.u32 %s41, 1
          %s204 = scalar_lea.sflag [#allocation3], %s203
          %s205 = sand.u32 %s41, 1
          %s206 = smul.addr %s205, 8
          %s207 = scalar_lea.vmem [#allocation2], %s206
          %s208 = smul.u32 2, %s25
          %s210 = ssub.s32 128, 128
          %211 = vsyncadd %s204, %s210
          %s212 = smul.addr %s24, 2
          %s213 = sadd.s32 %s208, %s212
          %s214 = smul.addr %s213, 64
          %s215 = scalar_lea.hbm %s0, %s214
          %s217 = sshll.u32 %s207, 4
          %s218 = int_to_ptr.vmem [resolvable:$true] %s217
          %220 = dma.hbm_to_vmem [thread:$0]  %s215, 128, %s218, %s204
        $region36: #{tpu_custom_call.1} parent=31 // pred_fallthru
          _
      $region32: #{tpu_custom_call.1} parent=5 // pred_fallthru
        _
      %p221 = scmp.le.s32.totalorder 1, %s17
      %p222 = scmp.lt.s32.totalorder %s17, 3
      %p223 = pnand %p221, %p222
      %p224 = pneg %p223
      // Predicated region
      $region37: #{tpu_custom_call.1} parent=5 // pred_check
        _
      $region38: #{tpu_custom_call.1} parent=5 // pred_check_branch
        %226 = sbr.rel (%p223) target = $region40
      $region39: #{tpu_custom_call.1} parent=5 // pred_region
        %s227 = ssub.s32 %s17, 1
        %s228 = sand.u32 %s44, 1
        %s229 = scalar_lea.sflag [#allocation3], %s228
        %s230 = sand.u32 %s44, 1
        %s231 = smul.addr %s230, 8
        %s232 = scalar_lea.vmem [#allocation2], %s231
        // Predicated region
        $region41: #{tpu_custom_call.1} parent=39 // pred_check
          %p233 = pneg %p57
        $region42: #{tpu_custom_call.1} parent=39 // pred_check_branch
          %235 = sbr.rel (%p233) target = $region44
        $region43: #{tpu_custom_call.1} parent=39 // pred_region
          %236 = dma.done %s229, 128
        $region44: #{tpu_custom_call.1} parent=39 // pred_fallthru
          _
        %s237 = sand.u32 %s44, 1
        %s238 = scalar_lea.sflag [#allocation3], %s237
        %s239 = sand.u32 %s44, 1
        %s240 = smul.addr %s239, 8
        %s241 = scalar_lea.vmem [#allocation2], %s240
        %p242 = pneg %p57
        %p243 = pneg %p54
        %p244 = pneg %p78
        %p245 = pneg %p75
        %p246 = pneg %p99
        %p247 = pneg %p96
        %p248 = pneg %p120
        %p249 = pneg %p117
        %p250 = pneg %p141
        %p251 = pneg %p138
        %p252 = pneg %p169
        %p253 = pneg %p166
        %s254 = sand.u32 %s156, 1
        %s255 = scalar_lea.sflag [#allocation4], %s254
        %s256 = sand.u32 %s156, 1
        %s257 = smul.addr %s256, 16
        %s258 = scalar_lea.vmem [#allocation5], %s257
        %s259 = smul.u32 2, %s27
        %s260 = smul.u32 2, %s27
        %v261 = vld [vmem:[%s232] sm:$0xff]
        %v262 = vld [vmem:[%s1] sm:$0xf]
        %v263 = vld [vmem:[%s2] sm:$0xf]
        %265 = vset.pattern.permute.xlu0 0
        %266 = vperm.xlu0 %265, %v263
        %v267 = vpop.permute.xlu0 %266
        %v270 = vcombine.high %v261, %v261
        %vm271 = vcmask 31744
        %v273 = vsel %vm271, %v262, 0
        %vm275 = vcmask 1043456
        %v276 = vsel %vm275, %v261, 0
        %v278 = vsel %vm275, %v270, 0
        %280 = vmatprep.subr.mxu0 %v278
        %281 = vmatpush1.msra.mxu0 %v276
        %282 = vmatprep.subr.mxu0 0.0
        %283 = vmatpush1.msra.mxu0 0.0
        %284 = vmatprep.subr.mxu0 0.0
        %285 = vmatpush1.msra.mxu0 0.0
        %286 = vmatprep.subr.mxu0 0.0
        %287 = vmatpush1.msra.mxu0 0.0
        %288 = vmatprep.subr.mxu0 0.0
        %289 = vmatpush1.msra.mxu0 0.0
        %290 = vmatprep.subr.mxu0 0.0
        %291 = vmatpush1.msra.mxu0 0.0
        %292 = vmatprep.subr.mxu0 0.0
        %293 = vmatpush1.msra.mxu0 0.0
        %294 = vmatprep.subr.mxu0 0.0
        %295 = vmatpush1.msra.mxu0 0.0
        %296 = vmatprep.subr.mxu0 0.0
        %297 = vmatpush1.msra.mxu0 0.0
        %298 = vmatprep.subr.mxu0 0.0
        %299 = vmatpush1.msra.mxu0 0.0
        %300 = vmatprep.subr.mxu0 0.0
        %301 = vmatpush1.msra.mxu0 0.0
        %302 = vmatprep.subr.mxu0 0.0
        %303 = vmatpush1.msra.mxu0 0.0
        %304 = vmatprep.subr.mxu0 0.0
        %305 = vmatpush1.msra.mxu0 0.0
        %306 = vmatprep.subr.mxu0 0.0
        %307 = vmatpush1.msra.mxu0 0.0
        %308 = vmatprep.subr.mxu0 0.0
        %309 = vmatpush1.msra.mxu0 0.0
        %310 = vmatprep.subr.mxu0 0.0
        %311 = vmatpush1.msra.mxu0 0.0
        %312 = vmatprep.subr.mxu0 0.0
        %313 = vmatpush1.msra.mxu0 0.0
        %314 = vmatprep.subr.mxu0 0.0
        %315 = vmatpush1.msra.mxu0 0.0
        %316 = vmatprep.subr.mxu0 0.0
        %317 = vmatpush1.msra.mxu0 0.0
        %318 = vmatprep.subr.mxu0 0.0
        %319 = vmatpush1.msra.mxu0 0.0
        %320 = vmatprep.subr.mxu0 0.0
        %321 = vmatpush1.msra.mxu0 0.0
        %322 = vmatprep.subr.mxu0 0.0
        %323 = vmatpush1.msra.mxu0 0.0
        %324 = vmatprep.subr.mxu0 0.0
        %325 = vmatpush1.msra.mxu0 0.0
        %326 = vmatprep.subr.mxu0 0.0
        %327 = vmatpush1.msra.mxu0 0.0
        %328 = vmatprep.subr.mxu0 0.0
        %329 = vmatpush1.msra.mxu0 0.0
        %330 = vmatprep.subr.mxu0 0.0
        %331 = vmatpush1.msra.mxu0 0.0
        %332 = vmatprep.subr.mxu0 0.0
        %333 = vmatpush1.msra.mxu0 0.0
        %334 = vmatprep.subr.mxu0 0.0
        %335 = vmatpush1.msra.mxu0 0.0
        %336 = vmatprep.subr.mxu0 0.0
        %337 = vmatpush1.msra.mxu0 0.0
        %338 = vmatprep.subr.mxu0 0.0
        %339 = vmatpush1.msra.mxu0 0.0
        %340 = vmatprep.subr.mxu0 0.0
        %341 = vmatpush1.msra.mxu0 0.0
        %342 = vmatprep.subr.mxu0 0.0
        %343 = vmatpush1.msra.mxu0 0.0
        %344 = vmatprep.mubr.f32.mxu0 0.0
        %345 = vmatmul.mubr.f32.gmra.mrb[0].mxu0 %v273
        %v346 = vpop.f32.mrb[0].mxu0
        %v347 = vadd.f32 %v267, %v346
        %v348 = vpop.f32.mrb[0].mxu0
        %v349 = vadd.f32 %v267, %v348
        %350 = vdwg.mxu0
        %v351 = vand.u32 2147483647, %v347
        %v352 = vand.u32 2147483647, %v349
        %v353 = vsub.f32 0.0, %v351
        %v354 = vsub.f32 0.0, %v352
        %v355 = vmul.f32 %v353, 1.442695
        %v356 = vpow.pop %v355
        %v357 = vmul.f32 %v354, 1.442695
        %v358 = vpow.pop %v357
        %v359 = vadd.f32 %v356, 1.0
        %v360 = vadd.f32 %v358, 1.0
        %v361 = vrcp.pop %v359
        %v362 = vrcp.pop %v360
        %vm363 = vcmp.ge.f32.partialorder %v347, 0.0
        %vm364 = vcmp.ge.f32.partialorder %v349, 0.0
        %v365 = vmul.f32 %v356, %v361
        %v366 = vmul.f32 %v358, %v362
        %v367 = vsel %vm363, %v361, %v365
        %v368 = vsel %vm364, %v362, %v366
        %v369 = vmul.f32 %v347, %v367
        %v370 = vmul.f32 %v349, %v368
        %v371 = vld [vmem:[%s3] sm:$0xf]
        %v372 = vld [vmem:[%s4] sm:$0xf]
        %374 = vset.pattern.permute.xlu0 0
        %375 = vperm.xlu0 %374, %v372
        %v376 = vpop.permute.xlu0 %375
        %v379 = vsel %vm271, %v371, 0
        %v382 = vsel %vm275, %v369, 0
        %v385 = vsel %vm275, %v370, 0
        %387 = vmatprep.subr.mxu0 %v385
        %388 = vmatpush1.msra.mxu0 %v382
        %389 = vmatprep.subr.mxu0 0.0
        %390 = vmatpush1.msra.mxu0 0.0
        %391 = vmatprep.subr.mxu0 0.0
        %392 = vmatpush1.msra.mxu0 0.0
        %393 = vmatprep.subr.mxu0 0.0
        %394 = vmatpush1.msra.mxu0 0.0
        %395 = vmatprep.subr.mxu0 0.0
        %396 = vmatpush1.msra.mxu0 0.0
        %397 = vmatprep.subr.mxu0 0.0
        %398 = vmatpush1.msra.mxu0 0.0
        %399 = vmatprep.subr.mxu0 0.0
        %400 = vmatpush1.msra.mxu0 0.0
        %401 = vmatprep.subr.mxu0 0.0
        %402 = vmatpush1.msra.mxu0 0.0
        %403 = vmatprep.subr.mxu0 0.0
        %404 = vmatpush1.msra.mxu0 0.0
        %405 = vmatprep.subr.mxu0 0.0
        %406 = vmatpush1.msra.mxu0 0.0
        %407 = vmatprep.subr.mxu0 0.0
        %408 = vmatpush1.msra.mxu0 0.0
        %409 = vmatprep.subr.mxu0 0.0
        %410 = vmatpush1.msra.mxu0 0.0
        %411 = vmatprep.subr.mxu0 0.0
        %412 = vmatpush1.msra.mxu0 0.0
        %413 = vmatprep.subr.mxu0 0.0
        %414 = vmatpush1.msra.mxu0 0.0
        %415 = vmatprep.subr.mxu0 0.0
        %416 = vmatpush1.msra.mxu0 0.0
        %417 = vmatprep.subr.mxu0 0.0
        %418 = vmatpush1.msra.mxu0 0.0
        %419 = vmatprep.subr.mxu0 0.0
        %420 = vmatpush1.msra.mxu0 0.0
        %421 = vmatprep.subr.mxu0 0.0
        %422 = vmatpush1.msra.mxu0 0.0
        %423 = vmatprep.subr.mxu0 0.0
        %424 = vmatpush1.msra.mxu0 0.0
        %425 = vmatprep.subr.mxu0 0.0
        %426 = vmatpush1.msra.mxu0 0.0
        %427 = vmatprep.subr.mxu0 0.0
        %428 = vmatpush1.msra.mxu0 0.0
        %429 = vmatprep.subr.mxu0 0.0
        %430 = vmatpush1.msra.mxu0 0.0
        %431 = vmatprep.subr.mxu0 0.0
        %432 = vmatpush1.msra.mxu0 0.0
        %433 = vmatprep.subr.mxu0 0.0
        %434 = vmatpush1.msra.mxu0 0.0
        %435 = vmatprep.subr.mxu0 0.0
        %436 = vmatpush1.msra.mxu0 0.0
        %437 = vmatprep.subr.mxu0 0.0
        %438 = vmatpush1.msra.mxu0 0.0
        %439 = vmatprep.subr.mxu0 0.0
        %440 = vmatpush1.msra.mxu0 0.0
        %441 = vmatprep.subr.mxu0 0.0
        %442 = vmatpush1.msra.mxu0 0.0
        %443 = vmatprep.subr.mxu0 0.0
        %444 = vmatpush1.msra.mxu0 0.0
        %445 = vmatprep.subr.mxu0 0.0
        %446 = vmatpush1.msra.mxu0 0.0
        %447 = vmatprep.subr.mxu0 0.0
        %448 = vmatpush1.msra.mxu0 0.0
        %449 = vmatprep.subr.mxu0 0.0
        %450 = vmatpush1.msra.mxu0 0.0
        %451 = vmatprep.mubr.f32.mxu0 0.0
        %452 = vmatmul.mubr.f32.gmra.mrb[0].mxu0 %v379
        %v453 = vpop.f32.mrb[0].mxu0
        %v454 = vadd.f32 %v376, %v453
        %v455 = vpop.f32.mrb[0].mxu0
        %v456 = vadd.f32 %v376, %v455
        %457 = vdwg.mxu0
        %v458 = vand.u32 2147483647, %v454
        %v459 = vand.u32 2147483647, %v456
        %v460 = vsub.f32 0.0, %v458
        %v461 = vsub.f32 0.0, %v459
        %v462 = vmul.f32 %v460, 1.442695
        %v463 = vpow.pop %v462
        %v464 = vmul.f32 %v461, 1.442695
        %v465 = vpow.pop %v464
        %v466 = vadd.f32 %v463, 1.0
        %v467 = vadd.f32 %v465, 1.0
        %v468 = vrcp.pop %v466
        %v469 = vrcp.pop %v467
        %vm470 = vcmp.ge.f32.partialorder %v454, 0.0
        %vm471 = vcmp.ge.f32.partialorder %v456, 0.0
        %v472 = vmul.f32 %v463, %v468
        %v473 = vmul.f32 %v465, %v469
        %v474 = vsel %vm470, %v468, %v472
        %v475 = vsel %vm471, %v469, %v473
        %v476 = vmul.f32 %v454, %v474
        %v477 = vmul.f32 %v456, %v475
        %v480 = vrot.slane %v476, 6
        %v481 = vrot.slane %v477, 6
        %v484 = vrot.slane %v369, 6
        %v485 = vrot.slane %v370, 6
        %v488 = vrot.slane %v476, 4
        %v489 = vrot.slane %v477, 4
        %vm492 = vcmask 1041408
        %v493 = vsel %vm492, %v369, %v480
        %v494 = vsel %vm492, %v370, %v481
        %v495 = vsel %vm275, %v493, %v484
        %v496 = vsel %vm275, %v494, %v485
        %vm497 = vcmask 1045504
        %v498 = vsel %vm497, %v495, %v488
        %v499 = vsel %vm497, %v496, %v489
        %500 = vst [vmem:[%s258] sm:$0xff] %v498
        %501 = vst [vmem:[%s258 + $0x8] sm:$0xff] %v499
        %s502 = sand.u32 %s156, 1
        %s503 = scalar_lea.sflag [#allocation4], %s502
        %s504 = sand.u32 %s156, 1
        %s505 = smul.addr %s504, 16
        %s506 = scalar_lea.vmem [#allocation5], %s505
        // Predicated region
        $region45: #{tpu_custom_call.1} parent=39 // pred_check
          %p507 = pneg %p166
        $region46: #{tpu_custom_call.1} parent=39 // pred_check_branch
          %509 = sbr.rel (%p507) target = $region48
        $region47: #{tpu_custom_call.1} parent=39 // pred_region
          %s510 = smul.u32 2, %s27
          %s512 = ssub.s32 256, 256
          %513 = vsyncadd %s503, %s512
          %s514 = smul.addr %s26, 2
          %s515 = sadd.s32 %s510, %s514
          %s516 = smul.addr %s515, 128
          %s517 = scalar_lea.hbm %s5, %s516
          %s519 = sshll.u32 %s506, 4
          %s520 = int_to_ptr.vmem [resolvable:$true] %s519
          %522 = dma.vmem_to_hbm [thread:$0]  %s520, 256, %s517, %s503
        $region48: #{tpu_custom_call.1} parent=39 // pred_fallthru
          _
      $region40: #{tpu_custom_call.1} parent=5 // pred_fallthru
        _
      %p523 = scmp.le.s32.totalorder 2, %s17
      // Predicated region
      $region49: #{tpu_custom_call.1} parent=5 // pred_check
        %p524 = pneg %p523
      $region50: #{tpu_custom_call.1} parent=5 // pred_check_branch
        %526 = sbr.rel (%p524) target = $region52
      $region51: #{tpu_custom_call.1} parent=5 // pred_region
        %s527 = ssub.s32 %s17, 2
        // Predicated region
        $region53: #{tpu_custom_call.1} parent=51 // pred_check
          %p528 = pneg %p172
        $region54: #{tpu_custom_call.1} parent=51 // pred_check_branch
          %530 = sbr.rel (%p528) target = $region56
        $region55: #{tpu_custom_call.1} parent=51 // pred_region
          %s531 = sand.u32 %s157, 1
          %s532 = scalar_lea.sflag [#allocation4], %s531
          %s533 = sand.u32 %s157, 1
          %s534 = smul.addr %s533, 16
          %s535 = scalar_lea.vmem [#allocation5], %s534
          %536 = dma.done %s532, 256
        $region56: #{tpu_custom_call.1} parent=51 // pred_fallthru
          _
      $region52: #{tpu_custom_call.1} parent=5 // pred_fallthru
        _
    $region6: #{tpu_custom_call.1} parent=1 // loop_footer
      %s21 = sadd.s32 1, %s17
    $region7: #{tpu_custom_call.1} parent=1 // loop_footer_branch
      %16 = sbr.rel target = $region3
    $region8: #{tpu_custom_call.1} parent=1 // loop_exit
      _
    %537 = vsyncpa [#allocation3], 1
    %s538 = scalar_lea.sflag [#allocation3], 1
    %539 = vsyncpa %s538, 1
    %540 = vsyncpa [#allocation4], 1
    %s541 = scalar_lea.sflag [#allocation4], 1
    %542 = vsyncpa %s541, 1

</llo_original>
